<compile_context>
chip_gen: v7x
topology: tpu7x:2x2x1
jax: 0.10.0
libtpu: 0.0.40
codegen_flags: <defaults>
</compile_context>

<pallas_src>
import functools

import jax
import jax.numpy as jnp
from jax import lax
from jax.experimental import pallas as pl
from jax.experimental.pallas import tpu as pltpu

LAYER_NORM_EPS = 1e-12          # args.layer_norm_eps (intentionally not torch's 1e-5)
_LANE = 128
_SMALL_FALLBACK_BYTES = 128 * 1024   # below this, a fused XLA layernorm wins


def _transpose_norm_kernel(x_ref, w_ref, b_ref, o_ref, *, eps):
    # x_ref: (BB, C, TL) block; w_ref / b_ref: (C, 1).
    # Normalizing each (batch, position) column over the channel axis is
    # mathematically identical to transpose -> LayerNorm(C) -> transpose.
    x = x_ref[...].astype(jnp.float32)                 # (BB, C, TL)
    mean = jnp.mean(x, axis=1, keepdims=True)          # (BB, 1, TL)  XLU reduce
    xc = x - mean
    var = jnp.mean(xc * xc, axis=1, keepdims=True)     # biased, like torch LayerNorm
    inv = lax.rsqrt(var + eps)                         # EUP; free slot here
    w = w_ref[...][None, :, :]                         # (1, C, 1)
    b = b_ref[...][None, :, :]                         # (1, C, 1)
    o_ref[...] = (xc * inv * w + b).astype(o_ref.dtype)


def _vmem_capacity_bytes():
    try:
        return int(pltpu.get_tpu_info().vmem_capacity_bytes)
    except Exception:
        return 64 * 1024 * 1024        # conservative: v7x per-TC VMEM


def _choose_tiling(B, C, L, itemsize):
    """Pick (BB, TL, nb, nl): batch block, length tile, and grid extents."""
    vmem_cap = _vmem_capacity_bytes()
    # Working set per step ~ 2x(in+out) double buffers + ~4 f32 full-tile temps;
    # keep it well under physical VMEM (64 MiB on v7x, 128 MiB on v5e/v6e).
    ws_budget = min(vmem_cap // 3, 40 * 1024 * 1024)
    blk_target = 2 * 1024 * 1024                         # ~2 MiB input block
    per_col_ws = C * (4 * itemsize + 16)                 # working-set bytes / column
    per_col_in = C * itemsize                            # input-block bytes / column
    max_cols = min(ws_budget // max(per_col_ws, 1),
                   blk_target // max(per_col_in, 1))
    max_cols = max(_LANE, (max_cols // _LANE) * _LANE)

    if L <= max_cols:
        TL = L                       # single L tile: block dim == full array dim
        nl = 1
    else:
        TL = max_cols                # lane-dense 128-multiple interior tiles;
        nl = pl.cdiv(L, TL)          # ragged last tile is boundary-masked

    # Pack batches into the block when a single L tile leaves headroom
    # (amortizes the fixed per-step cost).  BB always divides B exactly.
    BB = 1
    if nl == 1:
        lp_cols = max(pl.cdiv(L, _LANE) * _LANE, _LANE)  # VMEM-padded cols / batch
        room = max(max_cols // lp_cols, 1)
        for d in range(min(B, room), 0, -1):
            if B % d == 0:
                BB = d
                break
    nb = B // BB

    # v7x megacore: never leave the grid at a single program when there is
    # meaningful work -- split L into >= 2 lane-dense tiles.
    if nb * nl == 1 and L > 2 * _LANE:
        TL = pl.cdiv(pl.cdiv(L, 2), _LANE) * _LANE
        nl = pl.cdiv(L, TL)

    return BB, TL, nb, nl


def _transpose_norm_jax(x, weight, bias, eps):
    # Fused XLA path for tiny tensors (equivalent to the torch forward).
    x32 = x.astype(jnp.float32)
    mean = jnp.mean(x32, axis=1, keepdims=True)
    var = jnp.mean((x32 - mean) ** 2, axis=1, keepdims=True)
    y = (x32 - mean) * lax.rsqrt(var + eps)
    y = y * weight[None, :, None] + bias[None, :, None]
    return y.astype(x.dtype)


def transpose_norm(x, weight, bias, *, eps=LAYER_NORM_EPS, force_pallas=False):
    """x: (B, C, L); weight, bias: (C,). Returns (B, C, L), LayerNorm over C."""
    B, C, L = x.shape
    itemsize = jnp.dtype(x.dtype).itemsize

    if not force_pallas and B * C * L * itemsize < _SMALL_FALLBACK_BYTES:
        return _transpose_norm_jax(x, weight, bias, eps)

    BB, TL, nb, nl = _choose_tiling(B, C, L, itemsize)
    vmem_cap = _vmem_capacity_bytes()

    w2 = weight.reshape(C, 1).astype(jnp.float32)
    b2 = bias.reshape(C, 1).astype(jnp.float32)

    kernel = functools.partial(_transpose_norm_kernel, eps=eps)

    out = pl.pallas_call(
        kernel,
        out_shape=jax.ShapeDtypeStruct((B, C, L), x.dtype),
        grid_spec=pltpu.PrefetchScalarGridSpec(
            num_scalar_prefetch=0,
            grid=(nb, nl),
            in_specs=[
                pl.BlockSpec((BB, C, TL), lambda b, l: (b, 0, l)),
                # Constant block index: the tiny (C, 1) params stay VMEM-resident
                # across all grid steps (no re-DMA); deliberately NOT in SMEM.
                pl.BlockSpec((C, 1), lambda b, l: (0, 0)),
                pl.BlockSpec((C, 1), lambda b, l: (0, 0)),
            ],
            out_specs=pl.BlockSpec((BB, C, TL), lambda b, l: (b, 0, l)),
        ),
        compiler_params=pltpu.CompilerParams(
            # Both axes independent -> megacore sharding on v7x's two TCs.
            dimension_semantics=("parallel", "parallel"),
            # Generation-aware limit: 32 MiB on v7x (64 MiB VMEM),
            # 64 MiB on v5e/v6e (128 MiB VMEM).
            vmem_limit_bytes=min(vmem_cap // 2, 64 * 1024 * 1024),
        ),
    )(x, w2, b2)

    return out


def transpose_norm_ref(x, weight, bias, eps=LAYER_NORM_EPS):
    # Pure-JAX reference mirroring the PyTorch forward literally.
    xt = jnp.transpose(x, (0, 2, 1))                       # (B, L, C)
    mean = jnp.mean(xt, axis=-1, keepdims=True)
    var = jnp.mean((xt - mean) ** 2, axis=-1, keepdims=True)
    y = (xt - mean) / jnp.sqrt(var + eps)
    y = y * weight + bias
    return jnp.transpose(y, (0, 2, 1))                     # (B, C, L)


if __name__ == "__main__":
    key = jax.random.PRNGKey(0)

    # Shipped config: B=2, C=16 (cnn_hidden_size), L=35 (gen_max_len).
    B, C, L = 2, 16, 35
    kx, kw, kb = jax.random.split(key, 3)
    x = jax.random.normal(kx, (B, C, L), dtype=jnp.float32)
    weight = jnp.ones((C,), jnp.float32) + 0.01 * jax.random.normal(kw, (C,), jnp.float32)
    bias = 0.01 * jax.random.normal(kb, (C,), jnp.float32)
    ref = transpose_norm_ref(x, weight, bias)

    # 1) Pallas path forced at the tiny shape (single ragged tile, TL == L).
    out_pallas = jax.block_until_ready(transpose_norm(x, weight, bias, force_pallas=True))
    assert out_pallas.shape == (B, C, L)
    assert jnp.max(jnp.abs(out_pallas - ref)) < 1e-4

    # 2) Auto-dispatch (tiny -> fused XLA fast path).
    out_auto = jax.block_until_ready(transpose_norm(x, weight, bias))
    assert jnp.max(jnp.abs(out_auto - ref)) < 1e-4

    # 3) Larger L: exercises batch packing, the >=2-program megacore split and the
    #    boundary-masked ragged last tile (no wrapper pad/slice).
    B2, C2, L2 = 4, 16, 1200
    x2 = jax.random.normal(jax.random.PRNGKey(1), (B2, C2, L2), dtype=jnp.float32)
    w2 = jnp.ones((C2,), jnp.float32) + 0.01 * jax.random.normal(
        jax.random.PRNGKey(2), (C2,), jnp.float32)
    b2 = 0.01 * jax.random.normal(jax.random.PRNGKey(3), (C2,), jnp.float32)
    out2 = jax.block_until_ready(transpose_norm(x2, w2, b2))
    ref2 = transpose_norm_ref(x2, w2, b2)
    assert out2.shape == (B2, C2, L2)
    assert jnp.max(jnp.abs(out2 - ref2)) < 1e-4

    print("KERNEL_OK")
</pallas_src>

<mosaic_0001>
module attributes {stable_mosaic.version = 11 : i64} {
  func.func @_transpose_norm_kernel(%arg0: i32, %arg1: i32, %arg2: memref<2x16x35xf32, #tpu.memory_space<vmem>>, %arg3: memref<16x1xf32, #tpu.memory_space<vmem>>, %arg4: memref<16x1xf32, #tpu.memory_space<vmem>>, %arg5: memref<2x16x35xf32, #tpu.memory_space<vmem>>) attributes {dimension_semantics = [#tpu.dimension_semantics<parallel>, #tpu.dimension_semantics<parallel>], iteration_bounds = array<i64: 1, 1>, scalar_prefetch = 0 : i64, scratch_operands = 0 : i64, tpu.core_type = #tpu.core_type<tc>, window_params = [{transform_indices = @transform_0, window_bounds = array<i64: 2, 16, 35>}, {pipeline_mode = #tpu.pipeline_mode<synchronous>, transform_indices = @transform_1, window_bounds = array<i64: 16, 1>}, {pipeline_mode = #tpu.pipeline_mode<synchronous>, transform_indices = @transform_2, window_bounds = array<i64: 16, 1>}, {transform_indices = @transform_3, window_bounds = array<i64: 2, 16, 35>}]} {
    %c0 = arith.constant 0 : index
    %c0_0 = arith.constant 0 : index
    %c0_1 = arith.constant 0 : index
    %0 = vector.load %arg2[%c0, %c0_0, %c0_1] : memref<2x16x35xf32, #tpu.memory_space<vmem>>, vector<2x16x35xf32>
    %cst = arith.constant dense<0.000000e+00> : vector<2x35xf32>
    %1 = vector.multi_reduction <add>, %0, %cst [1] : vector<2x16x35xf32> to vector<2x35xf32>
    %2 = vector.shape_cast %1 : vector<2x35xf32> to vector<2x1x35xf32>
    %cst_2 = arith.constant 1.600000e+01 : f32
    %3 = vector.broadcast %cst_2 : f32 to vector<2x1x35xf32>
    %4 = arith.divf %2, %3 : vector<2x1x35xf32>
    %5 = vector.broadcast %4 : vector<2x1x35xf32> to vector<2x16x35xf32>
    %6 = arith.subf %0, %5 : vector<2x16x35xf32>
    %7 = arith.mulf %6, %6 : vector<2x16x35xf32>
    %cst_3 = arith.constant dense<0.000000e+00> : vector<2x35xf32>
    %8 = vector.multi_reduction <add>, %7, %cst_3 [1] : vector<2x16x35xf32> to vector<2x35xf32>
    %9 = vector.shape_cast %8 : vector<2x35xf32> to vector<2x1x35xf32>
    %cst_4 = arith.constant 1.600000e+01 : f32
    %10 = vector.broadcast %cst_4 : f32 to vector<2x1x35xf32>
    %11 = arith.divf %9, %10 : vector<2x1x35xf32>
    %cst_5 = arith.constant 9.99999996E-13 : f32
    %12 = vector.broadcast %cst_5 : f32 to vector<2x1x35xf32>
    %13 = arith.addf %11, %12 : vector<2x1x35xf32>
    %14 = math.rsqrt %13 : vector<2x1x35xf32>
    %c0_6 = arith.constant 0 : index
    %c0_7 = arith.constant 0 : index
    %15 = vector.load %arg3[%c0_6, %c0_7] : memref<16x1xf32, #tpu.memory_space<vmem>>, vector<16x1xf32>
    %16 = vector.shape_cast %15 : vector<16x1xf32> to vector<1x16x1xf32>
    %c0_8 = arith.constant 0 : index
    %c0_9 = arith.constant 0 : index
    %17 = vector.load %arg4[%c0_8, %c0_9] : memref<16x1xf32, #tpu.memory_space<vmem>>, vector<16x1xf32>
    %18 = vector.shape_cast %17 : vector<16x1xf32> to vector<1x16x1xf32>
    %19 = vector.broadcast %14 : vector<2x1x35xf32> to vector<2x16x35xf32>
    %20 = arith.mulf %6, %19 : vector<2x16x35xf32>
    %21 = vector.broadcast %16 : vector<1x16x1xf32> to vector<2x16x35xf32>
    %22 = arith.mulf %20, %21 : vector<2x16x35xf32>
    %23 = vector.broadcast %18 : vector<1x16x1xf32> to vector<2x16x35xf32>
    %24 = arith.addf %22, %23 : vector<2x16x35xf32>
    %c0_10 = arith.constant 0 : index
    %c0_11 = arith.constant 0 : index
    %c0_12 = arith.constant 0 : index
    %25 = vector.load %arg5[%c0_10, %c0_11, %c0_12] : memref<2x16x35xf32, #tpu.memory_space<vmem>>, vector<2x16x35xf32>
    tpu.vector_store %arg5[%c0_10, %c0_11, %c0_12], %24 {strides = array<i32>} : memref<2x16x35xf32, #tpu.memory_space<vmem>>, vector<2x16x35xf32>,
    return
  }
  func.func @transform_0(%arg0: i32, %arg1: i32) -> (i32, i32, i32) {
    %c0_i32 = arith.constant 0 : i32
    %c0_i32_0 = arith.constant 0 : i32
    return %arg0, %c0_i32, %arg1 : i32, i32, i32
  }
  func.func @transform_1(%arg0: i32, %arg1: i32) -> (i32, i32) {
    %c0_i32 = arith.constant 0 : i32
    %c0_i32_0 = arith.constant 0 : i32
    %c0_i32_1 = arith.constant 0 : i32
    return %c0_i32, %c0_i32_0 : i32, i32
  }
  func.func @transform_2(%arg0: i32, %arg1: i32) -> (i32, i32) {
    %c0_i32 = arith.constant 0 : i32
    %c0_i32_0 = arith.constant 0 : i32
    %c0_i32_1 = arith.constant 0 : i32
    return %c0_i32, %c0_i32_0 : i32, i32
  }
  func.func @transform_3(%arg0: i32, %arg1: i32) -> (i32, i32, i32) {
    %c0_i32 = arith.constant 0 : i32
    %c0_i32_0 = arith.constant 0 : i32
    return %arg0, %c0_i32, %arg1 : i32, i32, i32
  }
}

</mosaic_0001>

<llo_original>
// kernel: tpu_custom_call.1
$region0: #{tpu_custom_call.1}
  #allocation0 [shape = 'u32[]', space=smem, size = 0x4, offset = 0x4, fixed_abs, tag = 'smem constant byte address 0x4 - core index']
  #allocation1 [shape = 'u32[144,128]{1,0:T(1,128)}', space=vmem, size = 0x12000, scoped, tag = 'internal scratch']
  %s0 = inlined_call_operand.vmem [shape: f32[2,16,35], index: 0, kind: input, shape index: {}]
  %s1 = inlined_call_operand.vmem [shape: f32[16,1], index: 1, kind: input, shape index: {}]
  %s2 = inlined_call_operand.vmem [shape: f32[16,1], index: 2, kind: input, shape index: {}]
  %s3 = inlined_call_operand.hbm [shape: f32[2,16,35], index: 3, kind: output, shape index: {}]
  %s4 = sld [smem:[#allocation0]]
  $region22: #{tpu_custom_call.1} parent=0
    _
  %s6 = ssub.s32 1, %s4
  %s7 = scalar_select 0, %s6, %s4
  $region1: #{tpu_custom_call.1} parent=0
    #allocation2 [shape = 'u8[16384]{0}', space=vmem, size = 0x4000, scoped, tag = 'output window, operand 0, single buffered']
    #allocation3 [shape = 's32[1]{0}', space=sflag, size = 0x4, scoped, tag = 'scoped memory for tpu_custom_call.1']
    %8 = vsyncpa [#allocation3], 0
    // Predicated region
    $region2: #{tpu_custom_call.1} parent=1 // pred_check
      _
    $region3: #{tpu_custom_call.1} parent=1 // pred_check_branch
      %10 = sbr.rel (0) target = $region5
    $region4: #{tpu_custom_call.1} parent=1 // pred_region
      _
    $region5: #{tpu_custom_call.1} parent=1 // pred_fallthru
      _
    // Predicated region
    $region6: #{tpu_custom_call.1} parent=1 // pred_check
      _
    $region7: #{tpu_custom_call.1} parent=1 // pred_check_branch
      %12 = sbr.rel (0) target = $region9
    $region8: #{tpu_custom_call.1} parent=1 // pred_region
      _
    $region9: #{tpu_custom_call.1} parent=1 // pred_fallthru
      _
    // Predicated region
    $region10: #{tpu_custom_call.1} parent=1 // pred_check
      _
    $region11: #{tpu_custom_call.1} parent=1 // pred_check_branch
      %14 = sbr.rel (0) target = $region13
    $region12: #{tpu_custom_call.1} parent=1 // pred_region
      _
    $region13: #{tpu_custom_call.1} parent=1 // pred_fallthru
      _
    %v15 = vld [vmem:[%s0] sm:$0xff]
    %v16 = vld [vmem:[%s0 + $0x8] sm:$0xff]
    %v17 = vld [vmem:[%s0 + $0x10] sm:$0xff]
    %v18 = vld [vmem:[%s0 + $0x18] sm:$0xff]
    %vm19 = vcmask 285696
    %v20 = vsel %vm19, %v15, 0.0
    %v21 = vsel %vm19, %v16, 0.0
    %v22 = vadd.f32 %v20, %v21
    %v23 = vrot.slane %v22, 4
    %v24 = vadd.f32 %v22, %v23
    %v25 = vrot.slane %v24, 2
    %v26 = vadd.f32 %v24, %v25
    %v27 = vrot.slane %v26, 1
    %v28 = vadd.f32 %v26, %v27
    %v29 = vsel %vm19, %v17, 0.0
    %v30 = vsel %vm19, %v18, 0.0
    %v31 = vadd.f32 %v29, %v30
    %v32 = vrot.slane %v31, 4
    %v33 = vadd.f32 %v31, %v32
    %v34 = vrot.slane %v33, 2
    %v35 = vadd.f32 %v33, %v34
    %v36 = vrot.slane %v35, 1
    %v37 = vadd.f32 %v35, %v36
    %v38 = vrcp.pop 16.0
    %v39 = vmul.f32 %v28, %v38
    %v40 = vmul.f32 %v37, %v38
    %v41 = vsub.f32 %v15, %v39
    %v42 = vsub.f32 %v16, %v39
    %v43 = vsub.f32 %v17, %v40
    %v44 = vsub.f32 %v18, %v40
    %v45 = vmul.f32 %v41, %v41
    %v46 = vmul.f32 %v42, %v42
    %v47 = vmul.f32 %v43, %v43
    %v48 = vmul.f32 %v44, %v44
    %v49 = vsel %vm19, %v45, 0.0
    %v50 = vsel %vm19, %v46, 0.0
    %v51 = vadd.f32 %v49, %v50
    %v52 = vrot.slane %v51, 4
    %v53 = vadd.f32 %v51, %v52
    %v54 = vrot.slane %v53, 2
    %v55 = vadd.f32 %v53, %v54
    %v56 = vrot.slane %v55, 1
    %v57 = vadd.f32 %v55, %v56
    %v58 = vsel %vm19, %v47, 0.0
    %v59 = vsel %vm19, %v48, 0.0
    %v60 = vadd.f32 %v58, %v59
    %v61 = vrot.slane %v60, 4
    %v62 = vadd.f32 %v60, %v61
    %v63 = vrot.slane %v62, 2
    %v64 = vadd.f32 %v62, %v63
    %v65 = vrot.slane %v64, 1
    %v66 = vadd.f32 %v64, %v65
    %v67 = vmul.f32 %v57, %v38
    %v68 = vmul.f32 %v66, %v38
    %v69 = vadd.f32 %v67, 1e-12
    %v70 = vadd.f32 %v68, 1e-12
    %v71 = vrsqrt.pop %v69
    %v72 = vrsqrt.pop %v70
    %v73 = vld [vmem:[%s1] sm:$0xff]
    %v74 = vld [vmem:[%s1 + $0x8] sm:$0xff]
    %v75 = vld [vmem:[%s2] sm:$0xff]
    %v76 = vld [vmem:[%s2 + $0x8] sm:$0xff]
    %v77 = vmul.f32 %v41, %v71
    %v78 = vmul.f32 %v42, %v71
    %v79 = vmul.f32 %v43, %v72
    %v80 = vmul.f32 %v44, %v72
    %82 = vset.pattern.permute.xlu0 0
    %83 = vperm.xlu0 %82, %v73
    %v84 = vpop.permute.xlu0 %83
    %87 = vset.pattern.permute.xlu0 0
    %88 = vperm.xlu0 %87, %v74
    %v89 = vpop.permute.xlu0 %88
    %v91 = vmul.f32 %v77, %v84
    %v92 = vmul.f32 %v78, %v89
    %v93 = vmul.f32 %v79, %v84
    %v94 = vmul.f32 %v80, %v89
    %96 = vset.pattern.permute.xlu0 0
    %97 = vperm.xlu0 %96, %v75
    %v98 = vpop.permute.xlu0 %97
    %101 = vset.pattern.permute.xlu0 0
    %102 = vperm.xlu0 %101, %v76
    %v103 = vpop.permute.xlu0 %102
    %v105 = vadd.f32 %v91, %v98
    %v106 = vadd.f32 %v92, %v103
    %v107 = vadd.f32 %v93, %v98
    %v108 = vadd.f32 %v94, %v103
    %109 = vst.msk [vmem:[#allocation2] sm:$0xff] %vm19, %v105
    %110 = vst.msk [vmem:[#allocation2 + $0x8] sm:$0xff] %vm19, %v106
    %111 = vst.msk [vmem:[#allocation2 + $0x10] sm:$0xff] %vm19, %v107
    %112 = vst.msk [vmem:[#allocation2 + $0x18] sm:$0xff] %vm19, %v108
    // Predicated region
    $region14: #{tpu_custom_call.1} parent=1 // pred_check
      _
    $region15: #{tpu_custom_call.1} parent=1 // pred_check_branch
      %114 = sbr.rel (0) target = $region17
    $region16: #{tpu_custom_call.1} parent=1 // pred_region
      %s116 = ssub.s32 512, 512
      %117 = vsyncadd [#allocation3], %s116
      %s118 = sshll.u32 [#allocation2], 4
      %s119 = int_to_ptr.vmem [resolvable:$true] %s118
      %124 = dma.vmem_to_hbm [thread:$0]  %s119, 512, %s3, [#allocation3], 128, 128, 8
    $region17: #{tpu_custom_call.1} parent=1 // pred_fallthru
      _
    // Predicated region
    $region18: #{tpu_custom_call.1} parent=1 // pred_check
      _
    $region19: #{tpu_custom_call.1} parent=1 // pred_check_branch
      %126 = sbr.rel (0) target = $region21
    $region20: #{tpu_custom_call.1} parent=1 // pred_region
      %127 = dma.done [#allocation3], 512
    $region21: #{tpu_custom_call.1} parent=1 // pred_fallthru
      _
    %128 = vsyncpa [#allocation3], 1

</llo_original>
